<compile_context>
chip_gen: v7x
topology: tpu7x:2x2x1
jax: 0.10.0
libtpu: 0.0.40
codegen_flags: <defaults>
</compile_context>

<pallas_src>
import jax
import jax.numpy as jnp
from jax.experimental import pallas as pl
from jax.experimental.pallas import tpu as pltpu

LN_EPS = 1e-5


def _round_up(x, m):
    return ((x + m - 1) // m) * m


def _cdiv(a, b):
    return (a + b - 1) // b


def prenorm_kernel(x_ref, w_ref, b_ref, o_ref, y_ref):
    """One (token-tile i, feature-tile j) grid step.

    x_ref : (TM, D)   token tile (block index constant over j -> fetched once per i)
    w_ref : (D, TN)   gamma-folded, pre-transposed weight tile (streamed over j)
    b_ref : (1, TN)   beta/bias-folded bias tile
    o_ref : (TM, TN)  output tile
    y_ref : (TM, D)   VMEM scratch: normalized tokens, reused across all j
    """
    # LayerNorm statistics once per token tile, two-pass in f32.
    @pl.when(pl.program_id(1) == 0)
    def _():
        x = x_ref[...].astype(jnp.float32)
        mean = jnp.mean(x, axis=-1, keepdims=True)
        xc = x - mean
        var = jnp.mean(xc * xc, axis=-1, keepdims=True)
        inv_std = jax.lax.rsqrt(var + LN_EPS)
        y_ref[...] = (xc * inv_std).astype(y_ref.dtype)

    # fn (Linear): MXU matmul with f32 accumulation, bias add, store.
    out = jnp.dot(y_ref[...], w_ref[...], preferred_element_type=jnp.float32)
    o_ref[...] = (out + b_ref[...].astype(jnp.float32)).astype(o_ref.dtype)


def prenorm(x, gamma, beta, w, b, *, tm=256, tn=512):
    """PreNorm(dim, Linear): Linear(LayerNorm(x)).

    x: (B, S, D); gamma/beta: (D,); w: (D_out, D); b: (D_out,)
    """
    B, S, D = x.shape
    D_out = w.shape[0]
    N = B * S
    x2 = x.reshape(N, D)

    # ---- fold the LayerNorm affine into the linear layer (once, f32) --------
    #   (xhat*gamma + beta) @ W^T + b == xhat @ (gamma[:,None]*W^T) + (beta @ W^T + b)
    w_t = jnp.transpose(w).astype(jnp.float32)              # (D, D_out)
    w_eff = gamma.astype(jnp.float32)[:, None] * w_t
    b_eff = beta.astype(jnp.float32) @ w_t + b.astype(jnp.float32)
    w_eff = w_eff.astype(w.dtype)
    b_eff = b_eff.astype(w.dtype)

    # ---- token tile: multiple of 8 sublanes; >=2 tiles for megacore/v7x -----
    tm = max(8, min(tm, _round_up(N, 8)))
    tm = _round_up(tm, 8)
    if N > 8 and _cdiv(N, tm) < 2:
        tm = max(8, _round_up(_cdiv(N, 2), 8))
    Np = _round_up(N, tm)
    if Np != N:
        # zero pad rows -> finite (bias-only) junk, sliced off below.
        x2 = jnp.pad(x2, ((0, Np - N), (0, 0)))

    # ---- output features: lane-dense, 256-aligned for the v6e/v7x MXU -------
    D_out_p = _round_up(D_out, 256)
    if D_out_p != D_out:
        w_eff = jnp.pad(w_eff, ((0, 0), (0, D_out_p - D_out)))
        b_eff = jnp.pad(b_eff, (0, D_out_p - D_out))
    tn = max(256, min(tn, D_out_p))
    if D_out_p % tn != 0:
        tn = 256
    b_eff = b_eff.reshape(1, D_out_p)

    grid = (Np // tm, D_out_p // tn)

    # ---- explicit VMEM budget (buffers + f32 temporaries, with headroom) ----
    x_it = jnp.dtype(x.dtype).itemsize
    w_it = jnp.dtype(w_eff.dtype).itemsize
    o_it = jnp.dtype(x.dtype).itemsize
    vmem_need = (2 * tm * D * x_it            # double-buffered x tiles
                 + tm * D * w_it              # normalized-x scratch
                 + 2 * D * tn * w_it          # double-buffered W_eff tiles
                 + 2 * tn * w_it              # bias tiles
                 + 2 * tm * tn * o_it         # double-buffered out tiles
                 + 4 * tm * D * 4)            # f32 LN temporaries
    try:
        vmem_cap = int(getattr(pltpu.get_tpu_info(), "vmem_capacity_bytes",
                               64 * 1024 * 1024))
    except Exception:  # pragma: no cover - conservative fallback
        vmem_cap = 64 * 1024 * 1024
    vmem_limit = min(int(0.9 * vmem_cap),
                     max(32 * 1024 * 1024, int(1.25 * vmem_need)))

    cost = pl.CostEstimate(
        flops=2 * Np * D * D_out_p,
        transcendentals=0,
        bytes_accessed=(Np * D * x_it + D * D_out_p * w_it
                        + Np * D_out_p * o_it + D_out_p * w_it),
    )

    out = pl.pallas_call(
        prenorm_kernel,
        out_shape=jax.ShapeDtypeStruct((Np, D_out_p), x.dtype),
        grid_spec=pltpu.PrefetchScalarGridSpec(
            num_scalar_prefetch=0,
            grid=grid,
            in_specs=[
                pl.BlockSpec((tm, D), lambda i, j: (i, 0)),   # x tile (const over j)
                pl.BlockSpec((D, tn), lambda i, j: (0, j)),   # W_eff tile
                pl.BlockSpec((1, tn), lambda i, j: (0, j)),   # b_eff tile
            ],
            out_specs=pl.BlockSpec((tm, tn), lambda i, j: (i, j)),
            scratch_shapes=[pltpu.VMEM((tm, D), w_eff.dtype)],
        ),
        compiler_params=pltpu.CompilerParams(
            dimension_semantics=("parallel", "arbitrary"),
            vmem_limit_bytes=vmem_limit,
        ),
        cost_estimate=cost,
    )(x2, w_eff, b_eff)

    return out[:N, :D_out].reshape(B, S, D_out)


def prenorm_reference(x, gamma, beta, w, b):
    xf = x.astype(jnp.float32)
    mean = jnp.mean(xf, axis=-1, keepdims=True)
    var = jnp.mean((xf - mean) ** 2, axis=-1, keepdims=True)
    xhat = (xf - mean) / jnp.sqrt(var + LN_EPS)
    y = xhat * gamma.astype(jnp.float32) + beta.astype(jnp.float32)
    return (y @ w.astype(jnp.float32).T + b.astype(jnp.float32)).astype(x.dtype)


# TODO(synk): PreNorm wraps an arbitrary `fn`; only the canonical Linear `fn`
# is fused here — other callables would need their own kernels.

if __name__ == "__main__":
    key = jax.random.PRNGKey(0)

    # --- case 1: f32, small dim (typical tiny-module test) ---
    B, S, D = 2, 8, 32
    k1, k2, k3, k4, k5 = jax.random.split(key, 5)
    x = jax.random.normal(k1, (B, S, D), dtype=jnp.float32)
    gamma = jnp.ones((D,), jnp.float32) + 0.1 * jax.random.normal(k2, (D,), jnp.float32)
    beta = 0.1 * jax.random.normal(k3, (D,), jnp.float32)
    w = jax.random.normal(k4, (D, D), dtype=jnp.float32) * (1.0 / jnp.sqrt(D))
    b = 0.01 * jax.random.normal(k5, (D,), dtype=jnp.float32)

    out = jax.block_until_ready(prenorm(x, gamma, beta, w, b))
    ref = prenorm_reference(x, gamma, beta, w, b)
    assert out.shape == (B, S, D)
    assert jnp.allclose(out, ref, atol=1e-4, rtol=1e-4), "mismatch vs reference (f32)"

    # --- case 2: bf16, lane-aligned dim (mixed-precision MXU path) ---
    D2 = 128
    k6, k7, k8, k9, k10 = jax.random.split(jax.random.PRNGKey(1), 5)
    x2 = jax.random.normal(k6, (B, S, D2), dtype=jnp.float32).astype(jnp.bfloat16)
    gamma2 = (jnp.ones((D2,)) + 0.1 * jax.random.normal(k7, (D2,))).astype(jnp.bfloat16)
    beta2 = (0.1 * jax.random.normal(k8, (D2,))).astype(jnp.bfloat16)
    w2 = (jax.random.normal(k9, (D2, D2)) * (1.0 / jnp.sqrt(D2))).astype(jnp.bfloat16)
    b2 = (0.01 * jax.random.normal(k10, (D2,))).astype(jnp.bfloat16)

    out2 = jax.block_until_ready(prenorm(x2, gamma2, beta2, w2, b2))
    ref2 = prenorm_reference(x2, gamma2, beta2, w2, b2)
    assert out2.shape == (B, S, D2)
    assert jnp.allclose(out2.astype(jnp.float32), ref2.astype(jnp.float32),
                        atol=5e-2, rtol=5e-2), "mismatch vs reference (bf16)"

    print("KERNEL_OK")
</pallas_src>

<mosaic_0001>
module attributes {stable_mosaic.version = 11 : i64} {
  func.func @prenorm_kernel(%arg0: i32, %arg1: i32, %arg2: memref<8x32xf32, #tpu.memory_space<vmem>>, %arg3: memref<32x256xf32, #tpu.memory_space<vmem>>, %arg4: memref<1x256xf32, #tpu.memory_space<vmem>>, %arg5: memref<8x256xf32, #tpu.memory_space<vmem>>, %arg6: memref<8x32xf32, #tpu.memory_space<vmem>>) attributes {dimension_semantics = [#tpu.dimension_semantics<parallel>, #tpu.dimension_semantics<arbitrary>], iteration_bounds = array<i64: 2, 1>, scalar_prefetch = 0 : i64, scratch_operands = 1 : i64, tpu.core_type = #tpu.core_type<tc>, window_params = [{transform_indices = @transform_0, window_bounds = array<i64: 8, 32>}, {transform_indices = @transform_1, window_bounds = array<i64: 32, 256>}, {transform_indices = @transform_2, window_bounds = array<i64: 1, 256>}, {transform_indices = @transform_3, window_bounds = array<i64: 8, 256>}]} {
    %c0_i32 = arith.constant 0 : i32
    %0 = arith.cmpi eq, %arg1, %c0_i32 : i32
    %1 = arith.extui %0 : i1 to i32
    %c0_i32_0 = arith.constant 0 : i32
    %2 = arith.cmpi ne, %1, %c0_i32_0 : i32
    scf.if %2 {
      %c0_8 = arith.constant 0 : index
      %c0_9 = arith.constant 0 : index
      %10 = vector.load %arg2[%c0_8, %c0_9] : memref<8x32xf32, #tpu.memory_space<vmem>>, vector<8x32xf32>
      %cst_10 = arith.constant dense<0.000000e+00> : vector<8xf32>
      %11 = vector.multi_reduction <add>, %10, %cst_10 [1] : vector<8x32xf32> to vector<8xf32>
      %12 = vector.shape_cast %11 : vector<8xf32> to vector<8x1xf32>
      %cst_11 = arith.constant 3.200000e+01 : f32
      %13 = vector.broadcast %cst_11 : f32 to vector<8x1xf32>
      %14 = arith.divf %12, %13 : vector<8x1xf32>
      %15 = vector.broadcast %14 : vector<8x1xf32> to vector<8x32xf32>
      %16 = arith.subf %10, %15 : vector<8x32xf32>
      %17 = arith.mulf %16, %16 : vector<8x32xf32>
      %cst_12 = arith.constant dense<0.000000e+00> : vector<8xf32>
      %18 = vector.multi_reduction <add>, %17, %cst_12 [1] : vector<8x32xf32> to vector<8xf32>
      %19 = vector.shape_cast %18 : vector<8xf32> to vector<8x1xf32>
      %cst_13 = arith.constant 3.200000e+01 : f32
      %20 = vector.broadcast %cst_13 : f32 to vector<8x1xf32>
      %21 = arith.divf %19, %20 : vector<8x1xf32>
      %cst_14 = arith.constant 9.99999974E-6 : f32
      %22 = vector.broadcast %cst_14 : f32 to vector<8x1xf32>
      %23 = arith.addf %21, %22 : vector<8x1xf32>
      %24 = math.rsqrt %23 : vector<8x1xf32>
      %25 = vector.broadcast %24 : vector<8x1xf32> to vector<8x32xf32>
      %26 = arith.mulf %16, %25 : vector<8x32xf32>
      %c0_15 = arith.constant 0 : index
      %c0_16 = arith.constant 0 : index
      %27 = vector.load %arg6[%c0_15, %c0_16] : memref<8x32xf32, #tpu.memory_space<vmem>>, vector<8x32xf32>
      tpu.vector_store %arg6[%c0_15, %c0_16], %26 {strides = array<i32>} : memref<8x32xf32, #tpu.memory_space<vmem>>, vector<8x32xf32>,
    } else {
    }
    %c0 = arith.constant 0 : index
    %c0_1 = arith.constant 0 : index
    %3 = vector.load %arg6[%c0, %c0_1] : memref<8x32xf32, #tpu.memory_space<vmem>>, vector<8x32xf32>
    %c0_2 = arith.constant 0 : index
    %c0_3 = arith.constant 0 : index
    %4 = vector.load %arg3[%c0_2, %c0_3] : memref<32x256xf32, #tpu.memory_space<vmem>>, vector<32x256xf32>
    %cst = arith.constant dense<0.000000e+00> : vector<8x256xf32>
    %5 = tpu.matmul %3, %4, %cst {dimension_numbers = #tpu.dot_dimension_numbers<[1], [0], [0], [1], [0, 0, 1, 1], [], []>} : vector<8x32xf32>, vector<32x256xf32>, vector<8x256xf32> -> vector<8x256xf32>
    %c0_4 = arith.constant 0 : index
    %c0_5 = arith.constant 0 : index
    %6 = vector.load %arg4[%c0_4, %c0_5] : memref<1x256xf32, #tpu.memory_space<vmem>>, vector<1x256xf32>
    %7 = vector.broadcast %6 : vector<1x256xf32> to vector<8x256xf32>
    %8 = arith.addf %5, %7 : vector<8x256xf32>
    %c0_6 = arith.constant 0 : index
    %c0_7 = arith.constant 0 : index
    %9 = vector.load %arg5[%c0_6, %c0_7] : memref<8x256xf32, #tpu.memory_space<vmem>>, vector<8x256xf32>
    tpu.vector_store %arg5[%c0_6, %c0_7], %8 {strides = array<i32>} : memref<8x256xf32, #tpu.memory_space<vmem>>, vector<8x256xf32>,
    return
  }
  func.func @transform_0(%arg0: i32, %arg1: i32) -> (i32, i32) {
    %c0_i32 = arith.constant 0 : i32
    %c0_i32_0 = arith.constant 0 : i32
    return %arg0, %c0_i32 : i32, i32
  }
  func.func @transform_1(%arg0: i32, %arg1: i32) -> (i32, i32) {
    %c0_i32 = arith.constant 0 : i32
    %c0_i32_0 = arith.constant 0 : i32
    return %c0_i32, %arg1 : i32, i32
  }
  func.func @transform_2(%arg0: i32, %arg1: i32) -> (i32, i32) {
    %c0_i32 = arith.constant 0 : i32
    %c0_i32_0 = arith.constant 0 : i32
    return %c0_i32, %arg1 : i32, i32
  }
  func.func @transform_3(%arg0: i32, %arg1: i32) -> (i32, i32) {
    %c0_i32 = arith.constant 0 : i32
    return %arg0, %arg1 : i32, i32
  }
}

</mosaic_0001>

<llo_original>
// kernel: tpu_custom_call.1
$region0: #{tpu_custom_call.1}
  #allocation0 [shape = 'u32[]', space=smem, size = 0x4, offset = 0x4, fixed_abs, tag = 'smem constant byte address 0x4 - core index']
  #allocation1 [shape = 'u32[144,128]{1,0:T(1,128)}', space=vmem, size = 0x12000, scoped, tag = 'internal scratch']
  #allocation2 [shape = 'f32[8,32]{1,0:T(8,128)}', space=vmem, size = 0x1000, scoped, tag = 'scratch operand']
  %s0 = inlined_call_operand.hbm [shape: f32[16,32], index: 0, kind: input, shape index: {}]
  %s1 = inlined_call_operand.hbm [shape: f32[32,256], index: 1, kind: input, shape index: {}]
  %s2 = inlined_call_operand.vmem [shape: f32[1,256], index: 2, kind: input, shape index: {}]
  %s3 = inlined_call_operand.hbm [shape: f32[16,256], index: 3, kind: output, shape index: {}]
  %s4 = sld [smem:[#allocation0]]
  $region57: #{tpu_custom_call.1} parent=0
    _
  %s6 = ssub.s32 1, %s4
  %s7 = scalar_select 0, %s6, %s4
  $region1: #{tpu_custom_call.1} parent=0
    #allocation3 [shape = 'u8[8192]{0}', space=vmem, size = 0x2000, scoped, tag = 'input window, operand 0']
    #allocation4 [shape = 's32[2]{0}', space=sflag, size = 0x8, scoped, tag = 'scoped memory for tpu_custom_call.1']
    #allocation5 [shape = 's32[2]{0}', space=sflag, size = 0x8, scoped, tag = 'scoped memory for tpu_custom_call.1']
    #allocation6 [shape = 'u8[32768]{0}', space=vmem, size = 0x8000, scoped, tag = 'input window, operand 1, single buffered']
    #allocation7 [shape = 's32[1]{0}', space=sflag, size = 0x4, scoped, tag = 'scoped memory for tpu_custom_call.1']
    #allocation8 [shape = 'u8[16384]{0}', space=vmem, size = 0x4000, scoped, tag = 'output window, operand 0']
    %8 = vsyncpa [#allocation4], 0
    %s9 = scalar_lea.sflag [#allocation4], 1
    %10 = vsyncpa %s9, 0
    %11 = vsyncpa [#allocation7], 0
    %12 = vsyncpa [#allocation5], 0
    %s13 = scalar_lea.sflag [#allocation5], 1
    %14 = vsyncpa %s13, 0
    loop: start=0, step=1, limit=4
    $region2: #{tpu_custom_call.1} parent=1 // loop_pre_header
      _
    $region3: #{tpu_custom_call.1} parent=1 // loop_header
      %s16 = sphi 0, %s20
      %p17 = scmp.ge.s32.totalorder %s16, 4
      %s23 = sphi 0, %s35
      %s24 = sphi 0, %s31
      %s25 = sphi 0, %s23
      %s26 = sphi 0, %s24
      %s27 = sphi 0, %s25
      %s28 = sphi 0, %s26
      %s38 = sphi 0, %s40
      %s41 = sphi 0, %s38
      %s42 = sphi 0, %s41
      %s58 = sphi 0, %s42
      %s64 = sphi 0, %s66
      %s67 = sphi 0, %s64
      %s68 = sphi 0, %s67
      %s84 = sphi 0, %s68
      %s90 = sphi 0, %s92
      %s93 = sphi 0, %s90
      %s94 = sphi 0, %s93
      %s110 = sphi 0, %s94
      %s118 = sphi 0, %s120
      %s121 = sphi 0, %s118
      %s122 = sphi 0, %s121
      %s138 = sphi 0, %s122
    $region4: #{tpu_custom_call.1} parent=1 // loop_header_branch
      %19 = sbr.rel (%p17) target = $region8
    $region5: #{tpu_custom_call.1} parent=1 // loop_body
      %s21 = ssub.s32 %s16, 1
      %s22 = ssub.s32 %s16, 2
      %s29 = sadd.s32 1, %s24
      %p30 = scmp.ge.s32.totalorder %s29, 1
      %s31 = scalar_select %p30, 0, %s29
      %s32 = sadd.s32 1, %s23
      %s33 = scalar_select %p30, %s32, %s23
      %p34 = scmp.ge.s32.totalorder %s33, 2
      %s35 = scalar_select %p34, 0, %s33
      %s36 = ssub.s32 %s23, %s35
      %p37 = scmp.eq.s32.totalorder %s36, 0
      %s39 = sadd.s32 %s38, 1
      %s40 = scalar_select %p37, %s38, %s39
      %p43 = pneg %p37
      %p44 = scmp.eq.s32.totalorder %s16, 1
      %p45 = por %p43, %p44
      %p46 = scmp.ne.s32.totalorder %s38, %s41
      %p47 = scmp.eq.s32.totalorder %s16, 0
      %p48 = por %p46, %p47
      %p49 = scmp.ne.s32.totalorder %s38, %s41
      %p50 = scmp.eq.s32.totalorder %s21, 1
      %p51 = por %p49, %p50
      %p52 = scmp.ne.s32.totalorder %s41, %s42
      %p53 = scmp.eq.s32.totalorder %s21, 0
      %p54 = por %p52, %p53
      %p55 = scmp.ne.s32.totalorder %s41, %s42
      %p56 = scmp.eq.s32.totalorder %s22, 1
      %p57 = por %p55, %p56
      %p59 = scmp.ne.s32.totalorder %s42, %s58
      %p60 = scmp.eq.s32.totalorder %s22, 0
      %p61 = por %p59, %p60
      %s62 = ssub.s32 %s24, %s31
      %p63 = scmp.eq.s32.totalorder %s62, 0
      %s65 = sadd.s32 %s64, 1
      %s66 = scalar_select %p63, %s64, %s65
      %p69 = pneg %p63
      %p70 = scmp.eq.s32.totalorder %s16, 1
      %p71 = por %p69, %p70
      %p72 = scmp.ne.s32.totalorder %s64, %s67
      %p73 = scmp.eq.s32.totalorder %s16, 0
      %p74 = por %p72, %p73
      %p75 = scmp.ne.s32.totalorder %s64, %s67
      %p76 = scmp.eq.s32.totalorder %s21, 1
      %p77 = por %p75, %p76
      %p78 = scmp.ne.s32.totalorder %s67, %s68
      %p79 = scmp.eq.s32.totalorder %s21, 0
      %p80 = por %p78, %p79
      %p81 = scmp.ne.s32.totalorder %s67, %s68
      %p82 = scmp.eq.s32.totalorder %s22, 1
      %p83 = por %p81, %p82
      %p85 = scmp.ne.s32.totalorder %s68, %s84
      %p86 = scmp.eq.s32.totalorder %s22, 0
      %p87 = por %p85, %p86
      %s88 = ssub.s32 %s24, %s31
      %p89 = scmp.eq.s32.totalorder %s88, 0
      %s91 = sadd.s32 %s90, 1
      %s92 = scalar_select %p89, %s90, %s91
      %p95 = pneg %p89
      %p96 = scmp.eq.s32.totalorder %s16, 1
      %p97 = por %p95, %p96
      %p98 = scmp.ne.s32.totalorder %s90, %s93
      %p99 = scmp.eq.s32.totalorder %s16, 0
      %p100 = por %p98, %p99
      %p101 = scmp.ne.s32.totalorder %s90, %s93
      %p102 = scmp.eq.s32.totalorder %s21, 1
      %p103 = por %p101, %p102
      %p104 = scmp.ne.s32.totalorder %s93, %s94
      %p105 = scmp.eq.s32.totalorder %s21, 0
      %p106 = por %p104, %p105
      %p107 = scmp.ne.s32.totalorder %s93, %s94
      %p108 = scmp.eq.s32.totalorder %s22, 1
      %p109 = por %p107, %p108
      %p111 = scmp.ne.s32.totalorder %s94, %s110
      %p112 = scmp.eq.s32.totalorder %s22, 0
      %p113 = por %p111, %p112
      %s114 = ssub.s32 %s23, %s35
      %s115 = ssub.s32 %s24, %s31
      %s116 = sor.u32 %s114, %s115
      %p117 = scmp.eq.s32.totalorder %s116, 0
      %s119 = sadd.s32 %s118, 1
      %s120 = scalar_select %p117, %s118, %s119
      %p123 = pneg %p117
      %p124 = scmp.eq.s32.totalorder %s16, 1
      %p125 = por %p123, %p124
      %p126 = scmp.ne.s32.totalorder %s118, %s121
      %p127 = scmp.eq.s32.totalorder %s16, 0
      %p128 = por %p126, %p127
      %p129 = scmp.ne.s32.totalorder %s118, %s121
      %p130 = scmp.eq.s32.totalorder %s21, 1
      %p131 = por %p129, %p130
      %p132 = scmp.ne.s32.totalorder %s121, %s122
      %p133 = scmp.eq.s32.totalorder %s21, 0
      %p134 = por %p132, %p133
      %p135 = scmp.ne.s32.totalorder %s121, %s122
      %p136 = scmp.eq.s32.totalorder %s22, 1
      %p137 = por %p135, %p136
      %p139 = scmp.ne.s32.totalorder %s122, %s138
      %p140 = scmp.eq.s32.totalorder %s22, 0
      %p141 = por %p139, %p140
      %p142 = scmp.le.s32.totalorder 1, %s16
      %p143 = scmp.lt.s32.totalorder %s16, 3
      %p144 = pnand %p142, %p143
      %p145 = pneg %p144
      // Predicated region
      $region9: #{tpu_custom_call.1} parent=5 // pred_check
        _
      $region10: #{tpu_custom_call.1} parent=5 // pred_check_branch
        %147 = sbr.rel (%p144) target = $region12
      $region11: #{tpu_custom_call.1} parent=5 // pred_region
        %s148 = ssub.s32 %s16, 1
        // Predicated region
        $region13: #{tpu_custom_call.1} parent=11 // pred_check
          %p149 = pneg %p80
        $region14: #{tpu_custom_call.1} parent=11 // pred_check_branch
          %151 = sbr.rel (%p149) target = $region16
        $region15: #{tpu_custom_call.1} parent=11 // pred_region
          %s152 = smul.u32 2, %s26
          %s154 = ssub.s32 1024, 1024
          %155 = vsyncadd [#allocation7], %s154
          %s156 = smul.addr %s152, 128
          %s157 = scalar_lea.hbm %s1, %s156
          %s158 = sshll.u32 [#allocation6], 4
          %s159 = int_to_ptr.vmem [resolvable:$true] %s158
          %164 = dma.hbm_to_vmem [thread:$0]  %s157, 1024, %s159, [#allocation7], 256, 256, 16
        $region16: #{tpu_custom_call.1} parent=11 // pred_fallthru
          _
        // Predicated region
        $region17: #{tpu_custom_call.1} parent=11 // pred_check
          %p165 = pneg %p106
        $region18: #{tpu_custom_call.1} parent=11 // pred_check_branch
          %167 = sbr.rel (%p165) target = $region20
        $region19: #{tpu_custom_call.1} parent=11 // pred_region
          %s168 = smul.u32 2, %s26
          %p169 = scmp.lt.s32.totalorder %s168, 1
          %s170 = scalar_select %p169, %s168, 1
          %s171 = scalar_lea.vmem %s2, %s170
          %s172 = smul.u32 2, %s26
        $region20: #{tpu_custom_call.1} parent=11 // pred_fallthru
          _
      $region12: #{tpu_custom_call.1} parent=5 // pred_fallthru
        _
      %p173 = scmp.lt.s32.totalorder %s16, 2
      // Predicated region
      $region21: #{tpu_custom_call.1} parent=5 // pred_check
        %p174 = pneg %p173
      $region22: #{tpu_custom_call.1} parent=5 // pred_check_branch
        %176 = sbr.rel (%p174) target = $region24
      $region23: #{tpu_custom_call.1} parent=5 // pred_region
        // Predicated region
        $region25: #{tpu_custom_call.1} parent=23 // pred_check
          %p177 = pneg %p48
        $region26: #{tpu_custom_call.1} parent=23 // pred_check_branch
          %179 = sbr.rel (%p177) target = $region28
        $region27: #{tpu_custom_call.1} parent=23 // pred_region
          %s180 = sand.u32 %s38, 1
          %s181 = scalar_lea.sflag [#allocation4], %s180
          %s182 = sand.u32 %s38, 1
          %s183 = smul.addr %s182, 8
          %s184 = scalar_lea.vmem [#allocation3], %s183
          %s186 = ssub.s32 128, 128
          %187 = vsyncadd %s181, %s186
          %s188 = smul.addr %s23, 128
          %s189 = scalar_lea.hbm %s0, %s188
          %s191 = sshll.u32 %s184, 4
          %s192 = int_to_ptr.vmem [resolvable:$true] %s191
          %194 = dma.hbm_to_vmem [thread:$0]  %s189, 128, %s192, %s181
        $region28: #{tpu_custom_call.1} parent=23 // pred_fallthru
          _
      $region24: #{tpu_custom_call.1} parent=5 // pred_fallthru
        _
      %p195 = scmp.le.s32.totalorder 1, %s16
      %p196 = scmp.lt.s32.totalorder %s16, 3
      %p197 = pnand %p195, %p196
      %p198 = pneg %p197
      // Predicated region
      $region29: #{tpu_custom_call.1} parent=5 // pred_check
        _
      $region30: #{tpu_custom_call.1} parent=5 // pred_check_branch
        %200 = sbr.rel (%p197) target = $region32
      $region31: #{tpu_custom_call.1} parent=5 // pred_region
        %s201 = ssub.s32 %s16, 1
        %s202 = sand.u32 %s41, 1
        %s203 = scalar_lea.sflag [#allocation4], %s202
        %s204 = sand.u32 %s41, 1
        %s205 = smul.addr %s204, 8
        %s206 = scalar_lea.vmem [#allocation3], %s205
        // Predicated region
        $region33: #{tpu_custom_call.1} parent=31 // pred_check
          %p207 = pneg %p54
        $region34: #{tpu_custom_call.1} parent=31 // pred_check_branch
          %209 = sbr.rel (%p207) target = $region36
        $region35: #{tpu_custom_call.1} parent=31 // pred_region
          %210 = dma.done %s203, 128
        $region36: #{tpu_custom_call.1} parent=31 // pred_fallthru
          _
        // Predicated region
        $region37: #{tpu_custom_call.1} parent=31 // pred_check
          %p211 = pneg %p80
        $region38: #{tpu_custom_call.1} parent=31 // pred_check_branch
          %213 = sbr.rel (%p211) target = $region40
        $region39: #{tpu_custom_call.1} parent=31 // pred_region
          %214 = dma.done [#allocation7], 1024
        $region40: #{tpu_custom_call.1} parent=31 // pred_fallthru
          _
        %s215 = sand.u32 %s41, 1
        %s216 = scalar_lea.sflag [#allocation4], %s215
        %s217 = sand.u32 %s41, 1
        %s218 = smul.addr %s217, 8
        %s219 = scalar_lea.vmem [#allocation3], %s218
        %p220 = pneg %p54
        %p221 = pneg %p51
        %p222 = pneg %p80
        %p223 = pneg %p77
        %s224 = smul.u32 2, %s26
        %p225 = scmp.lt.s32.totalorder %s224, 1
        %s226 = scalar_select %p225, %s224, 1
        %s227 = scalar_lea.vmem %s2, %s226
        %p228 = pneg %p106
        %p229 = pneg %p103
        %p230 = pneg %p134
        %p231 = pneg %p131
        %s232 = sand.u32 %s121, 1
        %s233 = scalar_lea.sflag [#allocation5], %s232
        %s234 = sand.u32 %s121, 1
        %s235 = smul.addr %s234, 16
        %s236 = scalar_lea.vmem [#allocation8], %s235
        %s237 = smul.u32 2, %s26
        %s238 = smul.u32 2, %s26
        %p239 = scmp.lt.s32.totalorder %s238, 1
        %s240 = scalar_select %p239, %s238, 1
        %s241 = scalar_lea.vmem %s2, %s240
        %s242 = smul.u32 2, %s26
        %s243 = smul.u32 2, %s26
        %p244 = scmp.eq.s32.totalorder %s26, 0
        // Predicated region
        $region41: #{tpu_custom_call.1} parent=31 // pred_check
          %p245 = pneg %p244
        $region42: #{tpu_custom_call.1} parent=31 // pred_check_branch
          %247 = sbr.rel (%p245) target = $region44
        $region43: #{tpu_custom_call.1} parent=31 // pred_region
          %v248 = vld [vmem:[%s206] sm:$0xff]
          %vm249 = vcmask 261120
          %v250 = vsel %vm249, %v248, 0.0
          %251 = vadd.xlane.f32.xlu0 %v250
          %v252 = vpop.xlane.xlu0 %251
          %v253 = vrcp.pop 32.0
          %v254 = vmul.f32 %v252, %v253
          %v255 = vsub.f32 %v248, %v254
          %v256 = vmul.f32 %v255, %v255
          %v257 = vsel %vm249, %v256, 0.0
          %258 = vadd.xlane.f32.xlu0 %v257
          %v259 = vpop.xlane.xlu0 %258
          %v260 = vmul.f32 %v259, %v253
          %v261 = vadd.f32 %v260, 1e-05
          %v262 = vrsqrt.pop %v261
          %v263 = vmul.f32 %v255, %v262
          %264 = vst.msk [vmem:[#allocation2] sm:$0xff] %vm249, %v263
        $region44: #{tpu_custom_call.1} parent=31 // pred_fallthru
          _
        %v265 = vld [vmem:[#allocation2] sm:$0xff]
        %v266 = vld [vmem:[#allocation6] sm:$0xff]
        %v267 = vld [vmem:[#allocation6 + $0x8] sm:$0xff]
        %v268 = vld [vmem:[#allocation6 + $0x10] sm:$0xff]
        %v269 = vld [vmem:[#allocation6 + $0x18] sm:$0xff]
        %v270 = vld [vmem:[#allocation6 + $0x20] sm:$0xff]
        %v271 = vld [vmem:[#allocation6 + $0x28] sm:$0xff]
        %v272 = vld [vmem:[#allocation6 + $0x30] sm:$0xff]
        %v273 = vld [vmem:[#allocation6 + $0x38] sm:$0xff]
        %v274 = vld [vmem:[%s241] sm:$0x3]
        %v276 = vlaneseq
        %v277 = vshrl.u32 %v276, 7
        %v278 = vsub.s32 0, %v277
        %v279 = vrot.slane %v274, %v278
        %v280 = vlaneseq
        %v281 = vshrl.u32 %v280, 7
        %v282 = vsub.s32 1, %v281
        %v283 = vrot.slane %v274, %v282
        %vm286 = vcmask 261120
        %v288 = vsel %vm286, %v265, 0
        %290 = vmatprep.subr.mxu0 %v267
        %291 = vmatpush1.msra.mxu0 %v266
        %292 = vmatprep.subr.mxu0 %v269
        %293 = vmatpush1.msra.mxu0 %v268
        %294 = vmatprep.subr.mxu0 %v271
        %295 = vmatpush1.msra.mxu0 %v270
        %296 = vmatprep.subr.mxu0 %v273
        %297 = vmatpush1.msra.mxu0 %v272
        %298 = vmatprep.subr.mxu0 0.0
        %299 = vmatpush1.msra.mxu0 0.0
        %300 = vmatprep.subr.mxu0 0.0
        %301 = vmatpush1.msra.mxu0 0.0
        %302 = vmatprep.subr.mxu0 0.0
        %303 = vmatpush1.msra.mxu0 0.0
        %304 = vmatprep.subr.mxu0 0.0
        %305 = vmatpush1.msra.mxu0 0.0
        %306 = vmatprep.subr.mxu0 0.0
        %307 = vmatpush1.msra.mxu0 0.0
        %308 = vmatprep.subr.mxu0 0.0
        %309 = vmatpush1.msra.mxu0 0.0
        %310 = vmatprep.subr.mxu0 0.0
        %311 = vmatpush1.msra.mxu0 0.0
        %312 = vmatprep.subr.mxu0 0.0
        %313 = vmatpush1.msra.mxu0 0.0
        %314 = vmatprep.subr.mxu0 0.0
        %315 = vmatpush1.msra.mxu0 0.0
        %316 = vmatprep.subr.mxu0 0.0
        %317 = vmatpush1.msra.mxu0 0.0
        %318 = vmatprep.subr.mxu0 0.0
        %319 = vmatpush1.msra.mxu0 0.0
        %320 = vmatprep.subr.mxu0 0.0
        %321 = vmatpush1.msra.mxu0 0.0
        %322 = vmatprep.subr.mxu0 0.0
        %323 = vmatpush1.msra.mxu0 0.0
        %324 = vmatprep.subr.mxu0 0.0
        %325 = vmatpush1.msra.mxu0 0.0
        %326 = vmatprep.subr.mxu0 0.0
        %327 = vmatpush1.msra.mxu0 0.0
        %328 = vmatprep.subr.mxu0 0.0
        %329 = vmatpush1.msra.mxu0 0.0
        %330 = vmatprep.subr.mxu0 0.0
        %331 = vmatpush1.msra.mxu0 0.0
        %332 = vmatprep.subr.mxu0 0.0
        %333 = vmatpush1.msra.mxu0 0.0
        %334 = vmatprep.subr.mxu0 0.0
        %335 = vmatpush1.msra.mxu0 0.0
        %336 = vmatprep.subr.mxu0 0.0
        %337 = vmatpush1.msra.mxu0 0.0
        %338 = vmatprep.subr.mxu0 0.0
        %339 = vmatpush1.msra.mxu0 0.0
        %340 = vmatprep.subr.mxu0 0.0
        %341 = vmatpush1.msra.mxu0 0.0
        %342 = vmatprep.subr.mxu0 0.0
        %343 = vmatpush1.msra.mxu0 0.0
        %344 = vmatprep.subr.mxu0 0.0
        %345 = vmatpush1.msra.mxu0 0.0
        %346 = vmatprep.subr.mxu0 0.0
        %347 = vmatpush1.msra.mxu0 0.0
        %348 = vmatprep.subr.mxu0 0.0
        %349 = vmatpush1.msra.mxu0 0.0
        %350 = vmatprep.subr.mxu0 0.0
        %351 = vmatpush1.msra.mxu0 0.0
        %352 = vmatprep.subr.mxu0 0.0
        %353 = vmatpush1.msra.mxu0 0.0
        %354 = vmatprep.mubr.f32.mxu0 0.0
        %355 = vmatmul.mubr.f32.gmra.mrb[0].mxu0 %v288
        %v356 = vpop.f32.mrb[0].mxu0
        %v357 = vadd.f32 %v279, %v356
        %v358 = vpop.f32.mrb[0].mxu0
        %v359 = vadd.f32 %v283, %v358
        %360 = vdwg.mxu0
        %361 = vst [vmem:[%s236] sm:$0xff] %v357
        %362 = vst [vmem:[%s236 + $0x8] sm:$0xff] %v359
        %s363 = sand.u32 %s121, 1
        %s364 = scalar_lea.sflag [#allocation5], %s363
        %s365 = sand.u32 %s121, 1
        %s366 = smul.addr %s365, 16
        %s367 = scalar_lea.vmem [#allocation8], %s366
        // Predicated region
        $region45: #{tpu_custom_call.1} parent=31 // pred_check
          %p368 = pneg %p131
        $region46: #{tpu_custom_call.1} parent=31 // pred_check_branch
          %370 = sbr.rel (%p368) target = $region48
        $region47: #{tpu_custom_call.1} parent=31 // pred_region
          %s371 = smul.u32 2, %s26
          %s373 = ssub.s32 256, 256
          %374 = vsyncadd %s364, %s373
          %s375 = smul.addr %s25, 2
          %s376 = sadd.s32 %s371, %s375
          %s377 = smul.addr %s376, 128
          %s378 = scalar_lea.hbm %s3, %s377
          %s380 = sshll.u32 %s367, 4
          %s381 = int_to_ptr.vmem [resolvable:$true] %s380
          %383 = dma.vmem_to_hbm [thread:$0]  %s381, 256, %s378, %s364
        $region48: #{tpu_custom_call.1} parent=31 // pred_fallthru
          _
      $region32: #{tpu_custom_call.1} parent=5 // pred_fallthru
        _
      %p384 = scmp.le.s32.totalorder 2, %s16
      // Predicated region
      $region49: #{tpu_custom_call.1} parent=5 // pred_check
        %p385 = pneg %p384
      $region50: #{tpu_custom_call.1} parent=5 // pred_check_branch
        %387 = sbr.rel (%p385) target = $region52
      $region51: #{tpu_custom_call.1} parent=5 // pred_region
        %s388 = ssub.s32 %s16, 2
        // Predicated region
        $region53: #{tpu_custom_call.1} parent=51 // pred_check
          %p389 = pneg %p137
        $region54: #{tpu_custom_call.1} parent=51 // pred_check_branch
          %391 = sbr.rel (%p389) target = $region56
        $region55: #{tpu_custom_call.1} parent=51 // pred_region
          %s392 = sand.u32 %s122, 1
          %s393 = scalar_lea.sflag [#allocation5], %s392
          %s394 = sand.u32 %s122, 1
          %s395 = smul.addr %s394, 16
          %s396 = scalar_lea.vmem [#allocation8], %s395
          %397 = dma.done %s393, 256
        $region56: #{tpu_custom_call.1} parent=51 // pred_fallthru
          _
      $region52: #{tpu_custom_call.1} parent=5 // pred_fallthru
        _
    $region6: #{tpu_custom_call.1} parent=1 // loop_footer
      %s20 = sadd.s32 1, %s16
    $region7: #{tpu_custom_call.1} parent=1 // loop_footer_branch
      %15 = sbr.rel target = $region3
    $region8: #{tpu_custom_call.1} parent=1 // loop_exit
      _
    %398 = vsyncpa [#allocation4], 1
    %s399 = scalar_lea.sflag [#allocation4], 1
    %400 = vsyncpa %s399, 1
    %401 = vsyncpa [#allocation7], 1
    %402 = vsyncpa [#allocation5], 1
    %s403 = scalar_lea.sflag [#allocation5], 1
    %404 = vsyncpa %s403, 1

</llo_original>
